<compile_context>
chip_gen: v5e
topology: v5e:2x2
jax: 0.10.0
libtpu: 0.0.40
codegen_flags: <defaults>
</compile_context>

<pallas_src>
import functools
import math

import jax
import jax.numpy as jnp
from jax.experimental import pallas as pl
from jax.experimental.pallas import tpu as pltpu


# --------------------------------------------------------------------------- #
# Kernel
# --------------------------------------------------------------------------- #
def _fs_kernel(w_ref, x_ref, o_ref, *, pretrain: bool):
    # w_ref: (1, TD)    x_ref / o_ref: (TB, TD); gate broadcasts over rows.
    w = w_ref[...].astype(jnp.float32)
    if pretrain:
        gate = jax.nn.sigmoid(w)  # EUP slot; fully hidden under the x-tile DMA
        o_ref[...] = (gate * x_ref[...].astype(jnp.float32)).astype(o_ref.dtype)
    else:
        # torch.round(torch.sigmoid(w)) == 1  iff  sigmoid(w) > 0.5
        # (the exact 0.5 tie rounds to 0 under round-half-to-even), so a single
        # f32 compare + select matches the reference exactly.
        keep = jax.nn.sigmoid(w) > 0.5
        zero = jnp.zeros((), dtype=o_ref.dtype)
        o_ref[...] = jnp.where(keep, x_ref[...], zero)


# --------------------------------------------------------------------------- #
# Tiling helpers (all trace-time Python)
# --------------------------------------------------------------------------- #
def _round_up(a: int, m: int) -> int:
    return ((a + m - 1) // m) * m


def _pick_lane_tile(d: int, max_lanes: int = 8192) -> int:
    """Largest 128-multiple divisor of d that is <= max_lanes (d % 128 == 0)."""
    if d <= max_lanes:
        return d
    m = d // 128
    best, k = 1, 1
    while k * k <= m:
        if m % k == 0:
            for c in (k, m // k):
                if 128 * c <= max_lanes and c > best:
                    best = c
        k += 1
    return 128 * best


def _pick_row_tile(r_aligned: int, target: int, row_align: int) -> int:
    """Row tile: multiple of row_align near `target`, preferring an exact
    divisor of r_aligned (avoids a masked trailing tile)."""
    if target >= r_aligned:
        return r_aligned
    lo = max(row_align, target // 2)
    cand, steps = target, 0
    while cand >= lo and steps < 4096:
        if r_aligned % cand == 0:
            return cand
        cand -= row_align
        steps += 1
    return target  # rare: accept one partial trailing tile


# --------------------------------------------------------------------------- #
# Plain-XLA path (tiny inputs, and the numerical reference)
# --------------------------------------------------------------------------- #
def _fs_layer_xla(x: jax.Array, weights: jax.Array, pretrain: bool) -> jax.Array:
    s = jax.nn.sigmoid(weights.astype(jnp.float32))
    if not pretrain:
        s = jnp.round(s)
    return (s * x.astype(jnp.float32)).astype(x.dtype)


# --------------------------------------------------------------------------- #
# Public wrapper
# --------------------------------------------------------------------------- #
def fs_layer(x: jax.Array,
             weights: jax.Array,
             pretrain: bool = True,
             *,
             tile_bytes: int = 2 * 1024 * 1024,
             min_pallas_bytes: int = 512 * 1024) -> jax.Array:
    """FSLayer forward: sigmoid(weights) (optionally hard-rounded) * x.

    x:       (..., dim)
    weights: (dim,)
    """
    orig_shape = x.shape
    dim = orig_shape[-1]
    assert weights.shape == (dim,)
    rows = int(math.prod(orig_shape[:-1])) if len(orig_shape) > 1 else 1
    itemsize = jnp.dtype(x.dtype).itemsize

    # Tiny inputs: pallas_call launch + ~0.35 us/grid-step dominates; let XLA fuse.
    if rows * dim * itemsize < min_pallas_bytes:
        return _fs_layer_xla(x, weights, pretrain)

    x2 = x.reshape(rows, dim)

    # --- lane-density fold: kernel always sees a 128-multiple last dim --------
    fold = 1 if dim % 128 == 0 else math.lcm(dim, 128) // dim
    D = fold * dim

    # --- lane tile (divisor of D, multiple of 128) ----------------------------
    TD = _pick_lane_tile(D)
    d_blocks = D // TD

    # --- row tile (dtype-aware sublane packing, ~2-4 MiB input tiles) ---------
    row_align = max(8, 32 // itemsize)             # f32: 8, bf16: 16, int8/fp8: 32
    tile_bytes = min(max(int(tile_bytes), 2 * 1024 * 1024), 4 * 1024 * 1024)
    target_tb = max(tile_bytes // (TD * itemsize), row_align)
    target_tb = (target_tb // row_align) * row_align

    R0 = pl.cdiv(rows, fold)                       # logical rows after fold
    R_aligned = _round_up(R0, row_align)

    TB = _pick_row_tile(R_aligned, target_tb, row_align)
    # v7x megacore: give the parallel row axis >= 2 blocks when it is the only axis.
    if d_blocks == 1 and TB == R_aligned and R_aligned >= 2 * row_align:
        TB = _round_up(pl.cdiv(R_aligned, 2), row_align)
    r_blocks = pl.cdiv(R_aligned, TB)

    # Pad rows so all tiles are dense when the slack is tiny; otherwise accept
    # one masked trailing tile (rare) instead of streaming megabytes of zeros.
    if r_blocks * TB - R_aligned <= 4 * row_align:
        R_final = r_blocks * TB
    else:
        R_final = R_aligned
    rows_padded = R_final * fold

    # --- wrapper-side layout plumbing (pad + fold) -----------------------------
    if rows_padded != rows:
        x2 = jnp.pad(x2, ((0, rows_padded - rows), (0, 0)))
    if fold > 1:
        x2 = x2.reshape(R_final, D)
        w2 = jnp.tile(weights, fold)               # gate for col c is weights[c % dim]
    else:
        w2 = weights
    w2 = w2.reshape(1, D)

    # --- grid / specs: dim axis outer so the weight tile stays resident -------
    if d_blocks == 1:
        grid = (r_blocks,)
        w_spec = pl.BlockSpec((1, TD), lambda i: (0, 0))
        x_spec = pl.BlockSpec((TB, TD), lambda i: (i, 0))
        o_spec = pl.BlockSpec((TB, TD), lambda i: (i, 0))
        dim_sem = ("parallel",)
    else:
        grid = (d_blocks, r_blocks)
        w_spec = pl.BlockSpec((1, TD), lambda j, i: (0, j))
        x_spec = pl.BlockSpec((TB, TD), lambda j, i: (i, j))
        o_spec = pl.BlockSpec((TB, TD), lambda j, i: (i, j))
        dim_sem = ("parallel", "parallel")

    # VMEM: double-buffered in + out tiles (+ tiny weight tile) with headroom;
    # capped well under v7x's 64 MiB physical VMEM, above v5e's 16 MiB default.
    tile_in_bytes = TB * TD * itemsize
    vmem_limit = int(min(48 * 1024 * 1024,
                         max(16 * 1024 * 1024,
                             4 * tile_in_bytes + 4 * TD * 4 + 2 * 1024 * 1024)))

    n_steps = d_blocks * r_blocks
    w_itemsize = jnp.dtype(w2.dtype).itemsize
    cost = pl.CostEstimate(
        flops=int(rows) * int(dim),
        transcendentals=int(TD) * int(n_steps),
        bytes_accessed=int(2 * R_final * D * itemsize + D * w_itemsize),
    )

    kernel = functools.partial(_fs_kernel, pretrain=pretrain)

    out2 = pl.pallas_call(
        kernel,
        out_shape=jax.ShapeDtypeStruct((R_final, D), x2.dtype),
        grid_spec=pltpu.PrefetchScalarGridSpec(
            num_scalar_prefetch=0,
            grid=grid,
            in_specs=[w_spec, x_spec],
            out_specs=o_spec,
        ),
        compiler_params=pltpu.CompilerParams(
            dimension_semantics=dim_sem,
            vmem_limit_bytes=vmem_limit,
        ),
        cost_estimate=cost,
    )(w2, x2)

    out = out2.reshape(rows_padded, dim)
    if rows_padded != rows:
        out = out[:rows]
    return out.reshape(orig_shape)


# --------------------------------------------------------------------------- #
# Self-test
# --------------------------------------------------------------------------- #
if __name__ == "__main__":
    key = jax.random.PRNGKey(0)
    ks = jax.random.split(key, 6)

    def make(shape, kx, kw):
        d = shape[-1]
        xv = jax.random.normal(kx, shape, dtype=jnp.float32)
        stdv = 1.0 / math.sqrt(d)   # matches PyTorch reset_parameters uniform(-stdv, stdv)
        wv = jax.random.uniform(kw, (d,), dtype=jnp.float32, minval=-stdv, maxval=stdv)
        return xv, wv

    # (1) small dim -> lane-fold path (fold=4, D=128)
    x1, w1 = make((8, 32), ks[0], ks[1])
    # (2) dim not a 128-multiple AND rows needing pad (fold=16, D=3200)
    x2, w2 = make((100, 200), ks[2], ks[3])
    # (3) 128-multiple dim, multi-row-block grid (TB=1024 -> 2 parallel blocks)
    x3, w3 = make((2048, 384), ks[4], ks[5])

    for (xv, wv) in [(x1, w1), (x2, w2), (x3, w3)]:
        for pre in (True, False):
            out = jax.block_until_ready(
                fs_layer(xv, wv, pretrain=pre, min_pallas_bytes=0))
            ref = _fs_layer_xla(xv, wv, pre)
            assert out.shape == xv.shape and out.dtype == xv.dtype
            assert jnp.allclose(out, ref, atol=1e-6, rtol=1e-6), (xv.shape, pre)

    # Default small-input XLA fast path stays consistent with the kernel path.
    out_fast = jax.block_until_ready(fs_layer(x1, w1, pretrain=True))
    assert jnp.allclose(out_fast, _fs_layer_xla(x1, w1, True), atol=1e-6, rtol=1e-6)

    print("KERNEL_OK")
</pallas_src>

<mosaic_0001>
module attributes {stable_mosaic.version = 11 : i64} {
  func.func @_fs_kernel(%arg0: i32, %arg1: memref<1x128xf32, #tpu.memory_space<vmem>>, %arg2: memref<8x128xf32, #tpu.memory_space<vmem>>, %arg3: memref<8x128xf32, #tpu.memory_space<vmem>>) attributes {dimension_semantics = [#tpu.dimension_semantics<parallel>], iteration_bounds = array<i64: 1>, scalar_prefetch = 0 : i64, scratch_operands = 0 : i64, tpu.core_type = #tpu.core_type<tc>, window_params = [{pipeline_mode = #tpu.pipeline_mode<synchronous>, transform_indices = @transform_0, window_bounds = array<i64: 1, 128>}, {transform_indices = @transform_1, window_bounds = array<i64: 8, 128>}, {transform_indices = @transform_2, window_bounds = array<i64: 8, 128>}]} {
    %c0 = arith.constant 0 : index
    %c0_0 = arith.constant 0 : index
    %0 = vector.load %arg1[%c0, %c0_0] : memref<1x128xf32, #tpu.memory_space<vmem>>, vector<1x128xf32>
    %1 = arith.negf %0 : vector<1x128xf32>
    %2 = math.exp %1 : vector<1x128xf32>
    %cst = arith.constant 1.000000e+00 : f32
    %3 = vector.broadcast %cst : f32 to vector<1x128xf32>
    %4 = arith.addf %3, %2 : vector<1x128xf32>
    %5 = arith.divf %3, %4 : vector<1x128xf32>
    %c0_1 = arith.constant 0 : index
    %c0_2 = arith.constant 0 : index
    %6 = vector.load %arg2[%c0_1, %c0_2] : memref<8x128xf32, #tpu.memory_space<vmem>>, vector<8x128xf32>
    %7 = vector.broadcast %5 : vector<1x128xf32> to vector<8x128xf32>
    %8 = arith.mulf %7, %6 : vector<8x128xf32>
    %c0_3 = arith.constant 0 : index
    %c0_4 = arith.constant 0 : index
    %9 = vector.load %arg3[%c0_3, %c0_4] : memref<8x128xf32, #tpu.memory_space<vmem>>, vector<8x128xf32>
    tpu.vector_store %arg3[%c0_3, %c0_4], %8 {strides = array<i32>} : memref<8x128xf32, #tpu.memory_space<vmem>>, vector<8x128xf32>,
    return
  }
  func.func @transform_0(%arg0: i32) -> (i32, i32) {
    %c0_i32 = arith.constant 0 : i32
    %c0_i32_0 = arith.constant 0 : i32
    %c0_i32_1 = arith.constant 0 : i32
    return %c0_i32, %c0_i32_0 : i32, i32
  }
  func.func @transform_1(%arg0: i32) -> (i32, i32) {
    %c0_i32 = arith.constant 0 : i32
    %c0_i32_0 = arith.constant 0 : i32
    return %arg0, %c0_i32 : i32, i32
  }
  func.func @transform_2(%arg0: i32) -> (i32, i32) {
    %c0_i32 = arith.constant 0 : i32
    %c0_i32_0 = arith.constant 0 : i32
    return %arg0, %c0_i32 : i32, i32
  }
}

</mosaic_0001>

<llo_original>
// kernel: tpu_custom_call.1
$region0: #{tpu_custom_call.1}
  #allocation0 [shape = 'u32[]', space=smem, size = 0x4, offset = 0x4, fixed_abs, tag = 'smem constant byte address 0x4 - core index']
  #allocation1 [shape = 'u32[72,128]{1,0:T(1,128)}', space=vmem, size = 0x9000, scoped, tag = 'internal scratch']
  %s0 = inlined_call_operand.hbm [shape: f32[1,128], index: 0, kind: input, shape index: {}]
  %s1 = inlined_call_operand.hbm [shape: f32[8,128], index: 1, kind: input, shape index: {}]
  %s2 = inlined_call_operand.hbm [shape: f32[8,128], index: 2, kind: output, shape index: {}]
  %s3 = sld [smem:[#allocation0]]
  $region26: #{tpu_custom_call.1} parent=0
    _
  %s5 = ssub.s32 1, %s3
  %s6 = scalar_select 0, %s5, %s3
  $region1: #{tpu_custom_call.1} parent=0
    #allocation2 [shape = 'u8[512]{0}', space=vmem, size = 0x400, scoped, tag = 'input window, operand 0, single buffered']
    #allocation3 [shape = 's32[1]{0}', space=sflag, size = 0x4, scoped, tag = 'scoped memory for tpu_custom_call.1']
    #allocation4 [shape = 's32[1]{0}', space=sflag, size = 0x4, scoped, tag = 'scoped memory for tpu_custom_call.1']
    #allocation5 [shape = 'u8[4096]{0}', space=vmem, size = 0x1000, scoped, tag = 'input window, operand 1, single buffered']
    #allocation6 [shape = 's32[1]{0}', space=sflag, size = 0x4, scoped, tag = 'scoped memory for tpu_custom_call.1']
    #allocation7 [shape = 'u8[4096]{0}', space=vmem, size = 0x1000, scoped, tag = 'output window, operand 0, single buffered']
    %7 = vsyncpa [#allocation3], 0
    %8 = vsyncpa [#allocation6], 0
    %9 = vsyncpa [#allocation4], 0
    // Predicated region
    $region2: #{tpu_custom_call.1} parent=1 // pred_check
      _
    $region3: #{tpu_custom_call.1} parent=1 // pred_check_branch
      %11 = sbr.rel (0) target = $region5
    $region4: #{tpu_custom_call.1} parent=1 // pred_region
      %13 = vsyncadd [#allocation3], 0
      %s15 = sshll.u32 %s0, 4
      %s16 = int_to_ptr.hbm [resolvable:$true] %s15
      %s17 = sshll.u32 [#allocation2], 4
      %s18 = int_to_ptr.vmem [resolvable:$true] %s17
      %20 = dma.hbm_to_vmem [thread:$0]  %s16, 16, %s18, [#allocation3]
    $region5: #{tpu_custom_call.1} parent=1 // pred_fallthru
      _
    // Predicated region
    $region6: #{tpu_custom_call.1} parent=1 // pred_check
      _
    $region7: #{tpu_custom_call.1} parent=1 // pred_check_branch
      %22 = sbr.rel (0) target = $region9
    $region8: #{tpu_custom_call.1} parent=1 // pred_region
      %24 = vsyncadd [#allocation6], 0
      %s26 = sshll.u32 %s1, 4
      %s27 = int_to_ptr.hbm [resolvable:$true] %s26
      %s28 = sshll.u32 [#allocation5], 4
      %s29 = int_to_ptr.vmem [resolvable:$true] %s28
      %31 = dma.hbm_to_vmem [thread:$0]  %s27, 128, %s29, [#allocation6]
    $region9: #{tpu_custom_call.1} parent=1 // pred_fallthru
      _
    // Predicated region
    $region10: #{tpu_custom_call.1} parent=1 // pred_check
      _
    $region11: #{tpu_custom_call.1} parent=1 // pred_check_branch
      %33 = sbr.rel (0) target = $region13
    $region12: #{tpu_custom_call.1} parent=1 // pred_region
      %35 = dma.done [#allocation3], 16
    $region13: #{tpu_custom_call.1} parent=1 // pred_fallthru
      _
    // Predicated region
    $region14: #{tpu_custom_call.1} parent=1 // pred_check
      _
    $region15: #{tpu_custom_call.1} parent=1 // pred_check_branch
      %37 = sbr.rel (0) target = $region17
    $region16: #{tpu_custom_call.1} parent=1 // pred_region
      %39 = dma.done [#allocation6], 128
    $region17: #{tpu_custom_call.1} parent=1 // pred_fallthru
      _
    %v40 = vld [vmem:[#allocation2] sm:$0x1]
    %v41 = vxor.u32 %v40, 2147483648
    %v42 = vmul.f32 %v41, 1.442695
    %v43 = vpow.pop %v42
    %v44 = vadd.f32 %v43, 1.0
    %v45 = vrcp.pop %v44
    %v46 = vmul.f32 %v44, %v45
    %v47 = vsub.f32 1.0, %v46
    %v48 = vmul.f32 %v45, %v47
    %v49 = vadd.f32 %v45, %v48
    %vm50 = vweird.f32 %v44
    %vm51 = vweird.f32 %v45
    %vm52 = vmor %vm50, %vm51
    %v53 = vsel %vm52, %v45, %v49
    %v54 = vand.u32 2147483647, %v44
    %vm55 = vcmp.eq.f32.partialorder %v54, 8.507059e+37
    %v56 = vand.u32 %v44, 2147483648
    %v57 = vor.u32 1.1754944e-38, %v56
    %v58 = vsel %vm55, %v57, %v53
    %v59 = vmul.f32 1.0, %v58
    %v60 = vld [vmem:[#allocation5] sm:$0xff]
    %v62 = vperm.slane %v59, 0
    %v64 = vmul.f32 %v62, %v60
    %65 = vst [vmem:[#allocation7] sm:$0xff] %v64
    // Predicated region
    $region18: #{tpu_custom_call.1} parent=1 // pred_check
      _
    $region19: #{tpu_custom_call.1} parent=1 // pred_check_branch
      %67 = sbr.rel (0) target = $region21
    $region20: #{tpu_custom_call.1} parent=1 // pred_region
      %69 = vsyncadd [#allocation4], 0
      %s71 = sshll.u32 [#allocation7], 4
      %s72 = int_to_ptr.vmem [resolvable:$true] %s71
      %s73 = sshll.u32 %s2, 4
      %s74 = int_to_ptr.hbm [resolvable:$true] %s73
      %76 = dma.vmem_to_hbm [thread:$0]  %s72, 128, %s74, [#allocation4]
    $region21: #{tpu_custom_call.1} parent=1 // pred_fallthru
      _
    // Predicated region
    $region22: #{tpu_custom_call.1} parent=1 // pred_check
      _
    $region23: #{tpu_custom_call.1} parent=1 // pred_check_branch
      %78 = sbr.rel (0) target = $region25
    $region24: #{tpu_custom_call.1} parent=1 // pred_region
      %80 = dma.done [#allocation4], 128
    $region25: #{tpu_custom_call.1} parent=1 // pred_fallthru
      _
    %81 = vsyncpa [#allocation3], 1
    %82 = vsyncpa [#allocation6], 1
    %83 = vsyncpa [#allocation4], 1

</llo_original>
